<compile_context>
chip_gen: v7x
topology: tpu7x:2x2x1
jax: 0.10.0
libtpu: 0.0.40
codegen_flags: <defaults>
</compile_context>

<pallas_src>
import functools
import numpy as np
import jax
import jax.numpy as jnp
from jax.experimental import pallas as pl
from jax.experimental.pallas import tpu as pltpu

NEG_INF = -1e30  # finite stand-in for masked_fill(-inf)


def _pick_block(n, target):
    """Largest block <= target that divides n exactly (or the full extent)."""
    if n <= target:
        return n
    for b in (target, target // 2, target // 4):
        if b >= 8 and n % b == 0:
            return b
    return n


# ----------------------------- Pallas kernels -----------------------------

def _linear_kernel(x_ref, w_ref, b_ref, o_ref):
    y = jnp.dot(x_ref[...].astype(jnp.bfloat16), w_ref[...].astype(jnp.bfloat16),
                preferred_element_type=jnp.float32) + b_ref[...]
    o_ref[...] = y.astype(o_ref.dtype)


def linear(x, w, b, *, block_m=256):
    M, Din = x.shape
    Dout = w.shape[1]
    bm = _pick_block(M, block_m)
    return pl.pallas_call(
        _linear_kernel,
        out_shape=jax.ShapeDtypeStruct((M, Dout), jnp.float32),
        grid=(M // bm,),
        in_specs=[pl.BlockSpec((bm, Din), lambda m: (m, 0)),
                  pl.BlockSpec((Din, Dout), lambda m: (0, 0)),
                  pl.BlockSpec((1, Dout), lambda m: (0, 0))],
        out_specs=pl.BlockSpec((bm, Dout), lambda m: (m, 0)),
        compiler_params=pltpu.CompilerParams(dimension_semantics=("parallel",)),
    )(x, w, b.reshape(1, Dout))


def _sdpa_kernel(q_ref, k_ref, v_ref, m_ref, o_ref, *, scale):
    q = q_ref[0].astype(jnp.bfloat16)            # (H, Nq, Dk)
    k = k_ref[0].astype(jnp.bfloat16)            # (H, Nk, Dk)
    v = v_ref[0].astype(jnp.bfloat16)            # (H, Nk, Dv)
    att = jax.lax.dot_general(q, k, (((2,), (2,)), ((0,), (0,))),
                              preferred_element_type=jnp.float32)      # (H, Nq, Nk)
    att = att * scale + m_ref[0]                 # mask (Mq, Nk) broadcasts over heads
    att = att - jnp.max(att, axis=-1, keepdims=True)
    p = jnp.exp(att)
    denom = jnp.sum(p, axis=-1, keepdims=True)
    p = p * pl.reciprocal(denom, approx=True)
    out = jax.lax.dot_general(p.astype(jnp.bfloat16), v, (((2,), (1,)), ((0,), (0,))),
                              preferred_element_type=jnp.float32)      # (H, Nq, Dv)
    o_ref[0] = out.astype(o_ref.dtype)


def sdpa(q, k, v, mask_add, scale):
    """q,k,v: (B, H, N, Dh); mask_add: (B, Mq, Nk) additive (Mq in {1, Nq})."""
    B, H, Nq, Dk = q.shape
    Nk = k.shape[2]
    Dv = v.shape[3]
    Mq = mask_add.shape[1]
    return pl.pallas_call(
        functools.partial(_sdpa_kernel, scale=scale),
        out_shape=jax.ShapeDtypeStruct((B, H, Nq, Dv), jnp.float32),
        grid=(B,),
        in_specs=[pl.BlockSpec((1, H, Nq, Dk), lambda b: (b, 0, 0, 0)),
                  pl.BlockSpec((1, H, Nk, Dk), lambda b: (b, 0, 0, 0)),
                  pl.BlockSpec((1, H, Nk, Dv), lambda b: (b, 0, 0, 0)),
                  pl.BlockSpec((1, Mq, Nk), lambda b: (b, 0, 0))],
        out_specs=pl.BlockSpec((1, H, Nq, Dv), lambda b: (b, 0, 0, 0)),
        compiler_params=pltpu.CompilerParams(dimension_semantics=("parallel",)),
    )(q, k, v, mask_add)


def _oproj_ln_kernel(x_ref, w_ref, b_ref, res_ref, g_ref, bt_ref, keep_ref, o_ref, *, eps):
    y = jnp.dot(x_ref[...].astype(jnp.bfloat16), w_ref[...].astype(jnp.bfloat16),
                preferred_element_type=jnp.float32) + b_ref[...]
    z = y + res_ref[...]
    mu = jnp.mean(z, axis=-1, keepdims=True)
    var = jnp.mean(jnp.square(z - mu), axis=-1, keepdims=True)
    zn = (z - mu) * jax.lax.rsqrt(var + eps)
    o_ref[...] = ((zn * g_ref[...] + bt_ref[...]) * keep_ref[...]).astype(o_ref.dtype)


def oproj_residual_layernorm(x, w, b, res, gamma, beta, keep, *, eps=1e-5, block_m=256):
    """out = keep * LayerNorm(res + x @ w + b). keep is (M,1) 0/1 pad mask."""
    M, Din = x.shape
    D = w.shape[1]
    bm = _pick_block(M, block_m)
    return pl.pallas_call(
        functools.partial(_oproj_ln_kernel, eps=eps),
        out_shape=jax.ShapeDtypeStruct((M, D), jnp.float32),
        grid=(M // bm,),
        in_specs=[pl.BlockSpec((bm, Din), lambda m: (m, 0)),
                  pl.BlockSpec((Din, D), lambda m: (0, 0)),
                  pl.BlockSpec((1, D), lambda m: (0, 0)),
                  pl.BlockSpec((bm, D), lambda m: (m, 0)),
                  pl.BlockSpec((1, D), lambda m: (0, 0)),
                  pl.BlockSpec((1, D), lambda m: (0, 0)),
                  pl.BlockSpec((bm, 1), lambda m: (m, 0))],
        out_specs=pl.BlockSpec((bm, D), lambda m: (m, 0)),
        compiler_params=pltpu.CompilerParams(dimension_semantics=("parallel",)),
    )(x, w, b.reshape(1, D), res, gamma.reshape(1, D), beta.reshape(1, D), keep)


def _ffn_kernel(x_ref, w1_ref, b1_ref, w2_ref, b2_ref, g_ref, bt_ref, keep_ref, o_ref, *, eps):
    x = x_ref[...]
    h1 = jnp.dot(x.astype(jnp.bfloat16), w1_ref[...].astype(jnp.bfloat16),
                 preferred_element_type=jnp.float32) + b1_ref[...]
    h1 = jnp.maximum(h1, 0.0)
    h2 = jnp.dot(h1.astype(jnp.bfloat16), w2_ref[...].astype(jnp.bfloat16),
                 preferred_element_type=jnp.float32) + b2_ref[...]
    z = h2 + x
    mu = jnp.mean(z, axis=-1, keepdims=True)
    var = jnp.mean(jnp.square(z - mu), axis=-1, keepdims=True)
    zn = (z - mu) * jax.lax.rsqrt(var + eps)
    o_ref[...] = ((zn * g_ref[...] + bt_ref[...]) * keep_ref[...]).astype(o_ref.dtype)


def ffn_residual_layernorm(x, w1, b1, w2, b2, gamma, beta, keep, *, eps=1e-5, block_m=256):
    """out = keep * LayerNorm(x + fc2(relu(fc1(x)))), d_ff intermediate never hits HBM."""
    M, D = x.shape
    Dff = w1.shape[1]
    bm = _pick_block(M, block_m)
    return pl.pallas_call(
        functools.partial(_ffn_kernel, eps=eps),
        out_shape=jax.ShapeDtypeStruct((M, D), jnp.float32),
        grid=(M // bm,),
        in_specs=[pl.BlockSpec((bm, D), lambda m: (m, 0)),
                  pl.BlockSpec((D, Dff), lambda m: (0, 0)),
                  pl.BlockSpec((1, Dff), lambda m: (0, 0)),
                  pl.BlockSpec((Dff, D), lambda m: (0, 0)),
                  pl.BlockSpec((1, D), lambda m: (0, 0)),
                  pl.BlockSpec((1, D), lambda m: (0, 0)),
                  pl.BlockSpec((1, D), lambda m: (0, 0)),
                  pl.BlockSpec((bm, 1), lambda m: (m, 0))],
        out_specs=pl.BlockSpec((bm, D), lambda m: (m, 0)),
        compiler_params=pltpu.CompilerParams(dimension_semantics=("parallel",)),
    )(x, w1, b1.reshape(1, Dff), w2, b2.reshape(1, D),
      gamma.reshape(1, D), beta.reshape(1, D), keep)


def _mesh_combine_kernel(sa_ref, ea_ref, w_ref, b_ref, o_ref, *, inv_sqrt_n, d_model):
    i = pl.program_id(1)
    sa = sa_ref[...]                                   # (bm, D)
    ea = ea_ref[0]                                     # (bm, D)
    # alpha = sigmoid([sa, ea] @ [W_sa; W_ea] + b) with the stacked (2D, D) weight;
    # the concat is folded away by contracting against the two static halves of the ref.
    logits = (jnp.dot(sa.astype(jnp.bfloat16), w_ref[0, :d_model, :].astype(jnp.bfloat16),
                      preferred_element_type=jnp.float32)
              + jnp.dot(ea.astype(jnp.bfloat16), w_ref[0, d_model:, :].astype(jnp.bfloat16),
                        preferred_element_type=jnp.float32)
              + b_ref[0])
    contrib = (ea * jax.nn.sigmoid(logits)) * inv_sqrt_n   # 1/sqrt(N_enc) folded here

    @pl.when(i == 0)
    def _():
        o_ref[...] = contrib

    @pl.when(i != 0)
    def _():
        o_ref[...] = o_ref[...] + contrib


def mesh_combine(sa_flat, ea_stack, alpha_w, alpha_b, n_enc, *, block_m=256):
    M, D = sa_flat.shape
    bm = _pick_block(M, block_m)
    return pl.pallas_call(
        functools.partial(_mesh_combine_kernel,
                          inv_sqrt_n=float(1.0 / np.sqrt(n_enc)), d_model=D),
        out_shape=jax.ShapeDtypeStruct((M, D), jnp.float32),
        grid=(M // bm, n_enc),
        in_specs=[pl.BlockSpec((bm, D), lambda m, i: (m, 0)),
                  pl.BlockSpec((1, bm, D), lambda m, i: (i, m, 0)),
                  pl.BlockSpec((1, 2 * D, D), lambda m, i: (i, 0, 0)),
                  pl.BlockSpec((1, 1, D), lambda m, i: (i, 0, 0))],
        out_specs=pl.BlockSpec((bm, D), lambda m, i: (m, 0)),
        compiler_params=pltpu.CompilerParams(dimension_semantics=("parallel", "arbitrary")),
    )(sa_flat, ea_stack, alpha_w, alpha_b)


def _logits_lse_kernel(x_ref, w_ref, logits_ref, lse_ref, m_sc, l_sc):
    v = pl.program_id(1)

    @pl.when(v == 0)
    def _():
        m_sc[...] = jnp.full_like(m_sc, -jnp.inf)
        l_sc[...] = jnp.zeros_like(l_sc)

    logits = jnp.dot(x_ref[...].astype(jnp.bfloat16), w_ref[...].astype(jnp.bfloat16),
                     preferred_element_type=jnp.float32)       # (bm, bv)
    logits_ref[...] = logits

    m_old = m_sc[...]
    m_new = jnp.maximum(m_old, jnp.max(logits, axis=-1, keepdims=True))
    l_sc[...] = l_sc[...] * jnp.exp(m_old - m_new) + \
        jnp.sum(jnp.exp(logits - m_new), axis=-1, keepdims=True)
    m_sc[...] = m_new

    @pl.when(v == pl.num_programs(1) - 1)
    def _():
        lse_ref[...] = m_sc[...] + jnp.log(l_sc[...])


def _sub_lse_kernel(logits_ref, lse_ref, o_ref):
    o_ref[...] = logits_ref[...] - lse_ref[...]


def logits_log_softmax(x, w, *, block_m=256, block_v=512):
    """log_softmax(x @ w) with the vocab axis tiled (online max/sum-exp, then subtract)."""
    M, D = x.shape
    V = w.shape[1]
    bm = _pick_block(M, block_m)
    bv = _pick_block(V, block_v)
    grid = (M // bm, V // bv)

    logits, lse = pl.pallas_call(
        _logits_lse_kernel,
        out_shape=(jax.ShapeDtypeStruct((M, V), jnp.float32),
                   jax.ShapeDtypeStruct((M, 1), jnp.float32)),
        grid=grid,
        in_specs=[pl.BlockSpec((bm, D), lambda m, v: (m, 0)),
                  pl.BlockSpec((D, bv), lambda m, v: (0, v))],
        out_specs=(pl.BlockSpec((bm, bv), lambda m, v: (m, v)),
                   pl.BlockSpec((bm, 1), lambda m, v: (m, 0))),
        scratch_shapes=[pltpu.VMEM((bm, 1), jnp.float32),
                        pltpu.VMEM((bm, 1), jnp.float32)],
        compiler_params=pltpu.CompilerParams(dimension_semantics=("parallel", "arbitrary")),
    )(x, w)

    return pl.pallas_call(
        _sub_lse_kernel,
        out_shape=jax.ShapeDtypeStruct((M, V), jnp.float32),
        grid=grid,
        in_specs=[pl.BlockSpec((bm, bv), lambda m, v: (m, v)),
                  pl.BlockSpec((bm, 1), lambda m, v: (m, 0))],
        out_specs=pl.BlockSpec((bm, bv), lambda m, v: (m, v)),
        compiler_params=pltpu.CompilerParams(dimension_semantics=("parallel", "parallel")),
    )(logits, lse)


# ----------------------------- model (JAX glue around the kernels) -----------------------------

def multi_head_attention(p, queries, keys, values, mask_add_b, keep, *, h, d_k, d_v):
    """keep * LayerNorm(queries + SDPA(fused-proj(q,k,v)) @ Wo). Dropout = eval (identity)."""
    B, Nq, D = queries.shape
    Nk = keys.shape[1]
    hdk, hdv = h * d_k, h * d_v

    q_flat = queries.reshape(B * Nq, D)
    if (queries is keys) and (keys is values):
        qkv = linear(q_flat, p["w_in"], p["b_in"])                       # fused QKV
        q, k, v = qkv[:, :hdk], qkv[:, hdk:2 * hdk], qkv[:, 2 * hdk:]
    else:
        q = linear(q_flat, p["w_in"][:, :hdk], p["b_in"][:hdk])
        kv_flat = keys.reshape(B * Nk, D)
        if keys is values:
            kv = linear(kv_flat, p["w_in"][:, hdk:], p["b_in"][hdk:])    # fused KV
            k, v = kv[:, :hdk], kv[:, hdk:]
        else:
            k = linear(kv_flat, p["w_in"][:, hdk:2 * hdk], p["b_in"][hdk:2 * hdk])
            v = linear(values.reshape(B * Nk, D), p["w_in"][:, 2 * hdk:], p["b_in"][2 * hdk:])

    q = q.reshape(B, Nq, h, d_k).transpose(0, 2, 1, 3)                   # (B, h, Nq, dk)
    k = k.reshape(B, Nk, h, d_k).transpose(0, 2, 1, 3)
    v = v.reshape(B, Nk, h, d_v).transpose(0, 2, 1, 3)

    out = sdpa(q, k, v, mask_add_b, 1.0 / np.sqrt(d_k))                  # (B, h, Nq, dv)
    out = out.transpose(0, 2, 1, 3).reshape(B * Nq, hdv)
    out = oproj_residual_layernorm(out, p["wo"], p["bo"], q_flat,
                                   p["ln_g"], p["ln_b"], keep)
    return out.reshape(B, Nq, D)


def meshed_decoder_layer(p, x, enc_output, keep, mask_self_add, mask_enc_add,
                         positional_emb, *, h, d_k, d_v, n_enc):
    B, S, D = x.shape
    self_att = multi_head_attention(p["self_att"], x, x, x, mask_self_add, keep,
                                    h=h, d_k=d_k, d_v=d_v)               # pad-zeroed inside
    sa_flat = self_att.reshape(B * S, D)

    enc_atts = []
    for ith in range(n_enc):
        mem = enc_output[:, ith]
        key = mem if positional_emb is None else mem + positional_emb
        ea = multi_head_attention(p["enc_att"], self_att, key, mem, mask_enc_add, keep,
                                  h=h, d_k=d_k, d_v=d_v)
        enc_atts.append(ea.reshape(B * S, D))

    ea_stack = jnp.stack(enc_atts, axis=0)                               # (N_enc, B*S, D)
    attn = mesh_combine(sa_flat, ea_stack, p["alpha_w"], p["alpha_b"], n_enc)

    ff = ffn_residual_layernorm(attn, p["pwff_w1"], p["pwff_b1"],
                                p["pwff_w2"], p["pwff_b2"],
                                p["pwff_ln_g"], p["pwff_ln_b"], keep)
    return ff.reshape(B, S, D)


def meshed_decoder_forward(params, tokens, encoder_output, mask_encoder=None, positional_emb=None,
                           *, padding_idx, h, d_k, d_v, n_enc):
    B, S = tokens.shape
    assert encoder_output.shape[1] == n_enc
    Nk_enc = encoder_output.shape[2]
    D = params["word_emb"].shape[1]

    mask_queries = (tokens == padding_idx)                                     # (B, S) bool
    causal = jnp.triu(jnp.ones((S, S), jnp.float32), k=1) > 0                  # (S, S) bool
    mask_self = jnp.logical_or(causal[None, :, :], mask_queries[:, None, :])   # (B, S, S)
    mask_self_add = jnp.where(mask_self, NEG_INF, 0.0).astype(jnp.float32)

    if mask_encoder is None:
        mask_enc_add = jnp.zeros((B, 1, Nk_enc), jnp.float32)                  # per-batch, tiny
    else:
        me = jnp.reshape(jnp.asarray(mask_encoder), (B, -1, Nk_enc))[:, :1, :]
        mask_enc_add = jnp.where(me, NEG_INF, 0.0).astype(jnp.float32)

    seq_pos = jnp.broadcast_to(jnp.arange(1, S + 1, dtype=jnp.int32)[None, :], (B, S))
    seq_pos = jnp.where(mask_queries, 0, seq_pos)

    out = params["word_emb"][tokens] + params["pos_emb"][seq_pos]              # (B, S, D)
    keep = jnp.where(mask_queries, 0.0, 1.0).astype(jnp.float32).reshape(B * S, 1)
    # TODO(synk): stateful (incremental decoding) running masks and beam-expansion of
    #             positional_emb are inference-loop bookkeeping, not kernel compute.

    for lp in params["layers"]:
        out = meshed_decoder_layer(lp, out, encoder_output, keep, mask_self_add,
                                   mask_enc_add, positional_emb,
                                   h=h, d_k=d_k, d_v=d_v, n_enc=n_enc)

    logp = logits_log_softmax(out.reshape(B * S, D), params["fc_w"])
    return logp.reshape(B, S, -1)


# ----------------------------- deterministic parameter init -----------------------------

def sinusoid_encoding_table(n_position, d_hid, padding_idx=None):
    pos = np.arange(n_position)[:, None].astype(np.float64)
    j = np.arange(d_hid)[None, :].astype(np.float64)
    angle = pos / np.power(10000.0, 2.0 * (j // 2) / d_hid)
    table = np.zeros((n_position, d_hid), np.float32)
    table[:, 0::2] = np.sin(angle[:, 0::2])
    table[:, 1::2] = np.cos(angle[:, 1::2])
    if padding_idx is not None:
        table[padding_idx] = 0.0
    return jnp.asarray(table)


def init_params(key, *, vocab_size, max_len, N_enc, N_dec, d_model, d_k, d_v, h, d_ff, padding_idx):
    keys = iter(jax.random.split(key, 256))

    def xavier(shape):
        fan_in, fan_out = shape[-2], shape[-1]
        limit = np.sqrt(6.0 / (fan_in + fan_out))
        return jax.random.uniform(next(keys), shape, jnp.float32, -limit, limit)

    def mha():
        wq = xavier((d_model, h * d_k))
        wk = xavier((d_model, h * d_k))
        wv = xavier((d_model, h * d_v))
        return {
            "w_in": jnp.concatenate([wq, wk, wv], axis=1),            # fused QKV weight
            "b_in": jnp.zeros((h * (2 * d_k + d_v),), jnp.float32),
            "wo": xavier((h * d_v, d_model)), "bo": jnp.zeros((d_model,), jnp.float32),
            "ln_g": jnp.ones((d_model,), jnp.float32), "ln_b": jnp.zeros((d_model,), jnp.float32),
        }

    word_emb = jax.random.normal(next(keys), (vocab_size, d_model), jnp.float32) * 0.02
    word_emb = word_emb.at[padding_idx].set(0.0)

    layers = []
    for _ in range(N_dec):
        layers.append({
            "self_att": mha(),
            "enc_att": mha(),
            # fc_alpha: torch Linear(2*d_model, d_model); stored transposed & stacked per encoder level
            "alpha_w": xavier((N_enc, 2 * d_model, d_model)),
            "alpha_b": jnp.zeros((N_enc, 1, d_model), jnp.float32),
            "pwff_w1": xavier((d_model, d_ff)), "pwff_b1": jnp.zeros((d_ff,), jnp.float32),
            "pwff_w2": xavier((d_ff, d_model)), "pwff_b2": jnp.zeros((d_model,), jnp.float32),
            "pwff_ln_g": jnp.ones((d_model,), jnp.float32),
            "pwff_ln_b": jnp.zeros((d_model,), jnp.float32),
        })

    return {
        "word_emb": word_emb,
        "pos_emb": sinusoid_encoding_table(max_len + 1, d_model, padding_idx=0),
        "layers": layers,
        "fc_w": xavier((d_model, vocab_size)),   # final Linear, no bias
    }


# ----------------------------- main -----------------------------

if __name__ == "__main__":
    # small, forward-consistent shapes
    vocab_size, max_len = 50, 20
    N_enc, N_dec = 3, 2
    d_model, d_k, d_v, h, d_ff = 32, 8, 8, 4, 64
    padding_idx = 0
    B, S, Nk_enc = 2, 8, 10

    root = jax.random.PRNGKey(0)
    k_tok, k_enc, k_par = jax.random.split(root, 3)

    tokens = jax.random.randint(k_tok, (B, S), 1, vocab_size, dtype=jnp.int32)
    tokens = tokens.at[:, -2:].set(padding_idx)            # trailing padding to exercise masks
    encoder_output = jax.random.normal(k_enc, (B, N_enc, Nk_enc, d_model), jnp.float32)

    params = init_params(k_par, vocab_size=vocab_size, max_len=max_len, N_enc=N_enc, N_dec=N_dec,
                         d_model=d_model, d_k=d_k, d_v=d_v, h=h, d_ff=d_ff, padding_idx=padding_idx)

    out = meshed_decoder_forward(params, tokens, encoder_output, mask_encoder=None,
                                 positional_emb=None, padding_idx=padding_idx,
                                 h=h, d_k=d_k, d_v=d_v, n_enc=N_enc)
    out = jax.block_until_ready(out)

    assert out.shape == (B, S, vocab_size), out.shape
    assert bool(jnp.all(jnp.isfinite(out)))
    # log_softmax rows must sum to ~1 in prob space
    assert bool(jnp.allclose(jnp.sum(jnp.exp(out), axis=-1), 1.0, atol=1e-4))
    print("KERNEL_OK")
</pallas_src>

<mosaic_0001>
module attributes {stable_mosaic.version = 11 : i64} {
  func.func @_linear_kernel(%arg0: i32, %arg1: memref<16x32xf32, #tpu.memory_space<vmem>>, %arg2: memref<32x96xf32, #tpu.memory_space<vmem>>, %arg3: memref<1x96xf32, #tpu.memory_space<vmem>>, %arg4: memref<16x96xf32, #tpu.memory_space<vmem>>) attributes {dimension_semantics = [#tpu.dimension_semantics<parallel>], iteration_bounds = array<i64: 1>, scalar_prefetch = 0 : i64, scratch_operands = 0 : i64, tpu.core_type = #tpu.core_type<tc>, window_params = [{transform_indices = @transform_0, window_bounds = array<i64: 16, 32>}, {pipeline_mode = #tpu.pipeline_mode<synchronous>, transform_indices = @transform_1, window_bounds = array<i64: 32, 96>}, {pipeline_mode = #tpu.pipeline_mode<synchronous>, transform_indices = @transform_2, window_bounds = array<i64: 1, 96>}, {transform_indices = @transform_3, window_bounds = array<i64: 16, 96>}]} {
    %c0 = arith.constant 0 : index
    %c0_0 = arith.constant 0 : index
    %0 = vector.load %arg1[%c0, %c0_0] : memref<16x32xf32, #tpu.memory_space<vmem>>, vector<16x32xf32>
    %1 = arith.truncf %0 : vector<16x32xf32> to vector<16x32xbf16>
    %c0_1 = arith.constant 0 : index
    %c0_2 = arith.constant 0 : index
    %2 = vector.load %arg2[%c0_1, %c0_2] : memref<32x96xf32, #tpu.memory_space<vmem>>, vector<32x96xf32>
    %3 = arith.truncf %2 : vector<32x96xf32> to vector<32x96xbf16>
    %cst = arith.constant dense<0.000000e+00> : vector<16x96xf32>
    %4 = tpu.matmul %1, %3, %cst {dimension_numbers = #tpu.dot_dimension_numbers<[1], [0], [0], [1], [0, 0, 1, 1], [], []>} : vector<16x32xbf16>, vector<32x96xbf16>, vector<16x96xf32> -> vector<16x96xf32>
    %c0_3 = arith.constant 0 : index
    %c0_4 = arith.constant 0 : index
    %5 = vector.load %arg3[%c0_3, %c0_4] : memref<1x96xf32, #tpu.memory_space<vmem>>, vector<1x96xf32>
    %6 = vector.broadcast %5 : vector<1x96xf32> to vector<16x96xf32>
    %7 = arith.addf %4, %6 : vector<16x96xf32>
    %c0_5 = arith.constant 0 : index
    %c0_6 = arith.constant 0 : index
    %8 = vector.load %arg4[%c0_5, %c0_6] : memref<16x96xf32, #tpu.memory_space<vmem>>, vector<16x96xf32>
    tpu.vector_store %arg4[%c0_5, %c0_6], %7 {strides = array<i32>} : memref<16x96xf32, #tpu.memory_space<vmem>>, vector<16x96xf32>,
    return
  }
  func.func @transform_0(%arg0: i32) -> (i32, i32) {
    %c0_i32 = arith.constant 0 : i32
    %c0_i32_0 = arith.constant 0 : i32
    return %arg0, %c0_i32 : i32, i32
  }
  func.func @transform_1(%arg0: i32) -> (i32, i32) {
    %c0_i32 = arith.constant 0 : i32
    %c0_i32_0 = arith.constant 0 : i32
    %c0_i32_1 = arith.constant 0 : i32
    return %c0_i32, %c0_i32_0 : i32, i32
  }
  func.func @transform_2(%arg0: i32) -> (i32, i32) {
    %c0_i32 = arith.constant 0 : i32
    %c0_i32_0 = arith.constant 0 : i32
    %c0_i32_1 = arith.constant 0 : i32
    return %c0_i32, %c0_i32_0 : i32, i32
  }
  func.func @transform_3(%arg0: i32) -> (i32, i32) {
    %c0_i32 = arith.constant 0 : i32
    %c0_i32_0 = arith.constant 0 : i32
    return %arg0, %c0_i32 : i32, i32
  }
}

</mosaic_0001>

<llo_original>
// kernel: tpu_custom_call.1
$region0: #{tpu_custom_call.1}
  #allocation0 [shape = 'u32[]', space=smem, size = 0x4, offset = 0x4, fixed_abs, tag = 'smem constant byte address 0x4 - core index']
  #allocation1 [shape = 'u32[144,128]{1,0:T(1,128)}', space=vmem, size = 0x12000, scoped, tag = 'internal scratch']
  %s0 = inlined_call_operand.hbm [shape: f32[16,32], index: 0, kind: input, shape index: {}]
  %s1 = inlined_call_operand.hbm [shape: f32[32,96], index: 1, kind: input, shape index: {}]
  %s2 = inlined_call_operand.vmem [shape: f32[1,96], index: 2, kind: input, shape index: {}]
  %s3 = inlined_call_operand.hbm [shape: f32[16,96], index: 3, kind: output, shape index: {}]
  %s4 = sld [smem:[#allocation0]]
  $region30: #{tpu_custom_call.1} parent=0
    _
  %s6 = ssub.s32 1, %s4
  %s7 = scalar_select 0, %s6, %s4
  $region1: #{tpu_custom_call.1} parent=0
    #allocation2 [shape = 'u8[8192]{0}', space=vmem, size = 0x2000, scoped, tag = 'input window, operand 0, single buffered']
    #allocation3 [shape = 's32[1]{0}', space=sflag, size = 0x4, scoped, tag = 'scoped memory for tpu_custom_call.1']
    #allocation4 [shape = 's32[1]{0}', space=sflag, size = 0x4, scoped, tag = 'scoped memory for tpu_custom_call.1']
    #allocation5 [shape = 'u8[16384]{0}', space=vmem, size = 0x4000, scoped, tag = 'input window, operand 1, single buffered']
    #allocation6 [shape = 's32[1]{0}', space=sflag, size = 0x4, scoped, tag = 'scoped memory for tpu_custom_call.1']
    #allocation7 [shape = 'u8[8192]{0}', space=vmem, size = 0x2000, scoped, tag = 'output window, operand 0, single buffered']
    %8 = vsyncpa [#allocation3], 0
    %9 = vsyncpa [#allocation6], 0
    %10 = vsyncpa [#allocation4], 0
    // Predicated region
    $region2: #{tpu_custom_call.1} parent=1 // pred_check
      _
    $region3: #{tpu_custom_call.1} parent=1 // pred_check_branch
      %12 = sbr.rel (0) target = $region5
    $region4: #{tpu_custom_call.1} parent=1 // pred_region
      %s14 = ssub.s32 256, 256
      %15 = vsyncadd [#allocation3], %s14
      %s16 = sshll.u32 [#allocation2], 4
      %s17 = int_to_ptr.vmem [resolvable:$true] %s16
      %22 = dma.hbm_to_vmem [thread:$0]  %s0, 256, %s17, [#allocation3], 128, 128, 8
    $region5: #{tpu_custom_call.1} parent=1 // pred_fallthru
      _
    // Predicated region
    $region6: #{tpu_custom_call.1} parent=1 // pred_check
      _
    $region7: #{tpu_custom_call.1} parent=1 // pred_check_branch
      %24 = sbr.rel (0) target = $region9
    $region8: #{tpu_custom_call.1} parent=1 // pred_region
      %s26 = ssub.s32 512, 512
      %27 = vsyncadd [#allocation6], %s26
      %s28 = sshll.u32 [#allocation5], 4
      %s29 = int_to_ptr.vmem [resolvable:$true] %s28
      %34 = dma.hbm_to_vmem [thread:$0]  %s1, 512, %s29, [#allocation6], 128, 128, 8
    $region9: #{tpu_custom_call.1} parent=1 // pred_fallthru
      _
    // Predicated region
    $region10: #{tpu_custom_call.1} parent=1 // pred_check
      _
    $region11: #{tpu_custom_call.1} parent=1 // pred_check_branch
      %36 = sbr.rel (0) target = $region13
    $region12: #{tpu_custom_call.1} parent=1 // pred_region
      _
    $region13: #{tpu_custom_call.1} parent=1 // pred_fallthru
      _
    // Predicated region
    $region14: #{tpu_custom_call.1} parent=1 // pred_check
      _
    $region15: #{tpu_custom_call.1} parent=1 // pred_check_branch
      %38 = sbr.rel (0) target = $region17
    $region16: #{tpu_custom_call.1} parent=1 // pred_region
      %39 = dma.done [#allocation3], 256
    $region17: #{tpu_custom_call.1} parent=1 // pred_fallthru
      _
    // Predicated region
    $region18: #{tpu_custom_call.1} parent=1 // pred_check
      _
    $region19: #{tpu_custom_call.1} parent=1 // pred_check_branch
      %41 = sbr.rel (0) target = $region21
    $region20: #{tpu_custom_call.1} parent=1 // pred_region
      %42 = dma.done [#allocation6], 512
    $region21: #{tpu_custom_call.1} parent=1 // pred_fallthru
      _
    %v44 = vld [vmem:[#allocation2] sm:$0xff]
    %v45 = vld [vmem:[#allocation2 + $0x8] sm:$0xff]
    %v46 = vpack.c.bf16 %v45, %v44
    %v47 = vld [vmem:[#allocation5] sm:$0xff]
    %v48 = vld [vmem:[#allocation5 + $0x8] sm:$0xff]
    %v49 = vld [vmem:[#allocation5 + $0x10] sm:$0xff]
    %v50 = vld [vmem:[#allocation5 + $0x18] sm:$0xff]
    %v51 = vpack.c.bf16 %v48, %v47
    %v52 = vpack.c.bf16 %v50, %v49
    %v53 = vld [vmem:[%s2] sm:$0x1]
    %v55 = vlaneseq
    %v56 = vshrl.u32 %v55, 7
    %v57 = vsub.s32 0, %v56
    %v58 = vrot.slane %v53, %v57
    %vm60 = vcmask 261120
    %v62 = vsel %vm60, %v46, 0
    %64 = vmatprep.subr.bf16.mxu0 0
    %65 = vmatpush1.bf16.msra.mxu0 %v51
    %66 = vmatprep.subr.bf16.mxu0 0
    %67 = vmatpush1.bf16.msra.mxu0 %v52
    %68 = vmatprep.subr.bf16.mxu0 0
    %69 = vmatpush1.bf16.msra.mxu0 0
    %70 = vmatprep.subr.bf16.mxu0 0
    %71 = vmatpush1.bf16.msra.mxu0 0
    %72 = vmatprep.subr.bf16.mxu0 0
    %73 = vmatpush1.bf16.msra.mxu0 0
    %74 = vmatprep.subr.bf16.mxu0 0
    %75 = vmatpush1.bf16.msra.mxu0 0
    %76 = vmatprep.subr.bf16.mxu0 0
    %77 = vmatpush1.bf16.msra.mxu0 0
    %78 = vmatprep.subr.bf16.mxu0 0
    %79 = vmatpush1.bf16.msra.mxu0 0
    %80 = vmatprep.subr.bf16.mxu0 0
    %81 = vmatpush1.bf16.msra.mxu0 0
    %82 = vmatprep.subr.bf16.mxu0 0
    %83 = vmatpush1.bf16.msra.mxu0 0
    %84 = vmatprep.subr.bf16.mxu0 0
    %85 = vmatpush1.bf16.msra.mxu0 0
    %86 = vmatprep.subr.bf16.mxu0 0
    %87 = vmatpush1.bf16.msra.mxu0 0
    %88 = vmatprep.subr.bf16.mxu0 0
    %89 = vmatpush1.bf16.msra.mxu0 0
    %90 = vmatprep.subr.bf16.mxu0 0
    %91 = vmatpush1.bf16.msra.mxu0 0
    %92 = vmatprep.subr.bf16.mxu0 0
    %93 = vmatpush1.bf16.msra.mxu0 0
    %94 = vmatprep.subr.bf16.mxu0 0
    %95 = vmatpush1.bf16.msra.mxu0 0
    %96 = vmatprep.mubr.bf16.mxu0 0
    %97 = vmatmul.mubr.bf16.gmra.mrb[0].mxu0 %v62
    %v98 = vpop.f32.mrb[0].mxu0
    %v99 = vadd.f32 %v58, %v98
    %v100 = vpop.f32.mrb[0].mxu0
    %v101 = vpop.f32.mrb[0].mxu0
    %v102 = vadd.f32 %v58, %v101
    %v103 = vpop.f32.mrb[0].mxu0
    %104 = vdwg.mxu0
    %vm105 = vcmask 785408
    %106 = vst.msk [vmem:[#allocation7] sm:$0xff] %vm105, %v99
    %107 = vst.msk [vmem:[#allocation7 + $0x8] sm:$0xff] %vm105, %v102
    // Predicated region
    $region22: #{tpu_custom_call.1} parent=1 // pred_check
      _
    $region23: #{tpu_custom_call.1} parent=1 // pred_check_branch
      %109 = sbr.rel (0) target = $region25
    $region24: #{tpu_custom_call.1} parent=1 // pred_region
      %s111 = ssub.s32 256, 256
      %112 = vsyncadd [#allocation4], %s111
      %s113 = sshll.u32 [#allocation7], 4
      %s114 = int_to_ptr.vmem [resolvable:$true] %s113
      %119 = dma.vmem_to_hbm [thread:$0]  %s114, 256, %s3, [#allocation4], 128, 128, 8
    $region25: #{tpu_custom_call.1} parent=1 // pred_fallthru
      _
    // Predicated region
    $region26: #{tpu_custom_call.1} parent=1 // pred_check
      _
    $region27: #{tpu_custom_call.1} parent=1 // pred_check_branch
      %121 = sbr.rel (0) target = $region29
    $region28: #{tpu_custom_call.1} parent=1 // pred_region
      %122 = dma.done [#allocation4], 256
    $region29: #{tpu_custom_call.1} parent=1 // pred_fallthru
      _
    %123 = vsyncpa [#allocation3], 1
    %124 = vsyncpa [#allocation6], 1
    %125 = vsyncpa [#allocation4], 1

</llo_original>
